<compile_context>
chip_gen: v7x
topology: tpu7x:2x2x1
jax: 0.10.0
libtpu: 0.0.40
codegen_flags: <defaults>
</compile_context>

<pallas_src>
import functools

import jax
import jax.numpy as jnp
from jax import lax
from jax.experimental import pallas as pl
from jax.experimental.pallas import tpu as pltpu


def _head_kernel(x_ref, wq_ref, wk_ref, wv_ref, o_ref, *, scale):
    # x_ref : (T, C)   one batch element (batch dim squeezed by the BlockSpec)
    # w*_ref: (C, H)   projection weights (x @ W == Linear(x), bias=False)
    # o_ref : (T, H)
    x = x_ref[...]

    # Three lane-aligned projection matmuls on the MXU (f32 accumulation).
    q = jnp.dot(x, wq_ref[...], preferred_element_type=jnp.float32)   # (T, H)
    k = jnp.dot(x, wk_ref[...], preferred_element_type=jnp.float32)   # (T, H)
    v = jnp.dot(x, wv_ref[...], preferred_element_type=jnp.float32)   # (T, H)

    # Attention scores: contract the head dim of q and k directly (no k.T,
    # no XLU transpose / extra VMEM copy).
    s = lax.dot_general(q, k, (((1,), (1,)), ((), ())),
                        preferred_element_type=jnp.float32) * scale   # (T, T)

    # Causal mask (lower-triangular).  The diagonal is always unmasked, so the
    # row max stays finite and the softmax denominator is strictly positive.
    seq = s.shape[0]
    row = lax.broadcasted_iota(jnp.int32, (seq, seq), 0)
    col = lax.broadcasted_iota(jnp.int32, (seq, seq), 1)
    s = jnp.where(col <= row, s, -jnp.inf)

    # Numerically-stable softmax; exp lands on the EUP.
    m = jnp.max(s, axis=-1, keepdims=True)
    p = jnp.exp(s - m)
    l = jnp.sum(p, axis=-1, keepdims=True)
    acc = jnp.dot(p, v, preferred_element_type=jnp.float32)           # (T, H)

    # Exact reciprocal over a (T, 1) vector: negligible cost, exact parity.
    o_ref[...] = (acc * pl.reciprocal(l, approx=False)).astype(o_ref.dtype)


@jax.jit
def head_forward(x, wq, wk, wv):
    B, T, C = x.shape
    H = wk.shape[-1]
    scale = float(H) ** -0.5

    # Advisory cost hint for XLA's scheduler.
    flops = B * (3 * 2 * T * C * H + 2 * 2 * T * T * H)
    bytes_accessed = 4 * (B * T * C + 3 * C * H + B * T * H)
    cost = pl.CostEstimate(flops=flops, transcendentals=B * T * T,
                           bytes_accessed=bytes_accessed)

    return pl.pallas_call(
        functools.partial(_head_kernel, scale=scale),
        out_shape=jax.ShapeDtypeStruct((B, T, H), x.dtype),
        grid=(B,),
        in_specs=[
            pl.BlockSpec((None, T, C), lambda b: (b, 0, 0)),   # per-batch x tile
            pl.BlockSpec((C, H), lambda b: (0, 0)),            # Wq (revisited)
            pl.BlockSpec((C, H), lambda b: (0, 0)),            # Wk
            pl.BlockSpec((C, H), lambda b: (0, 0)),            # Wv
        ],
        out_specs=pl.BlockSpec((None, T, H), lambda b: (b, 0, 0)),
        compiler_params=pltpu.CompilerParams(
            dimension_semantics=("parallel",)),                # megacore on v7x
        cost_estimate=cost,
    )(x, wq, wk, wv)


def head_reference(x, wq, wk, wv):
    # pure-JAX reference matching the PyTorch forward (dropout in eval mode)
    k = x @ wk
    q = x @ wq
    v = x @ wv
    H = k.shape[-1]
    wei = (q @ jnp.swapaxes(k, -2, -1)) * (H ** -0.5)
    T = x.shape[1]
    tril = jnp.tril(jnp.ones((T, T), dtype=bool))
    wei = jnp.where(tril, wei, -jnp.inf)
    wei = jax.nn.softmax(wei, axis=-1)
    return wei @ v


if __name__ == "__main__":
    # Module hyperparameters (small, consistent with the forward pass)
    n_embd = 32      # C
    block_size = 8   # max T
    head_size = 16   # H
    B, T = 2, block_size

    key = jax.random.PRNGKey(0)
    kx, kk, kq, kv = jax.random.split(key, 4)

    x = jax.random.normal(kx, (B, T, n_embd), dtype=jnp.float32)
    # deterministic "Linear(bias=False)" weights stored as (C, H): x @ W == Linear(x)
    wk = jax.random.normal(kk, (n_embd, head_size), dtype=jnp.float32) * 0.05
    wq = jax.random.normal(kq, (n_embd, head_size), dtype=jnp.float32) * 0.05
    wv = jax.random.normal(kv, (n_embd, head_size), dtype=jnp.float32) * 0.05

    out = head_forward(x, wq, wk, wv)
    out = jax.block_until_ready(out)

    ref = head_reference(x, wq, wk, wv)
    assert out.shape == (B, T, head_size)
    assert jnp.allclose(out, ref, atol=1e-5, rtol=1e-5), "mismatch vs reference"

    print("KERNEL_OK")
</pallas_src>

<mosaic_0001>
module attributes {stable_mosaic.version = 11 : i64} {
  func.func @_head_kernel(%arg0: i32, %arg1: memref<1x8x32xf32, #tpu.memory_space<vmem>>, %arg2: memref<32x16xf32, #tpu.memory_space<vmem>>, %arg3: memref<32x16xf32, #tpu.memory_space<vmem>>, %arg4: memref<32x16xf32, #tpu.memory_space<vmem>>, %arg5: memref<1x8x16xf32, #tpu.memory_space<vmem>>) attributes {dimension_semantics = [#tpu.dimension_semantics<parallel>], iteration_bounds = array<i64: 2>, scalar_prefetch = 0 : i64, scratch_operands = 0 : i64, tpu.core_type = #tpu.core_type<tc>, window_params = [{transform_indices = @transform_0, window_bounds = array<i64: 1, 8, 32>}, {pipeline_mode = #tpu.pipeline_mode<synchronous>, transform_indices = @transform_1, window_bounds = array<i64: 32, 16>}, {pipeline_mode = #tpu.pipeline_mode<synchronous>, transform_indices = @transform_2, window_bounds = array<i64: 32, 16>}, {pipeline_mode = #tpu.pipeline_mode<synchronous>, transform_indices = @transform_3, window_bounds = array<i64: 32, 16>}, {transform_indices = @transform_4, window_bounds = array<i64: 1, 8, 16>}]} {
    %c0 = arith.constant 0 : index
    %c0_0 = arith.constant 0 : index
    %c0_1 = arith.constant 0 : index
    %0 = vector.load %arg1[%c0, %c0_0, %c0_1] : memref<1x8x32xf32, #tpu.memory_space<vmem>>, vector<1x8x32xf32>
    %1 = vector.shape_cast %0 : vector<1x8x32xf32> to vector<8x32xf32>
    %c0_2 = arith.constant 0 : index
    %c0_3 = arith.constant 0 : index
    %2 = vector.load %arg2[%c0_2, %c0_3] : memref<32x16xf32, #tpu.memory_space<vmem>>, vector<32x16xf32>
    %cst = arith.constant dense<0.000000e+00> : vector<8x16xf32>
    %3 = tpu.matmul %1, %2, %cst {dimension_numbers = #tpu.dot_dimension_numbers<[1], [0], [0], [1], [0, 0, 1, 1], [], []>} : vector<8x32xf32>, vector<32x16xf32>, vector<8x16xf32> -> vector<8x16xf32>
    %c0_4 = arith.constant 0 : index
    %c0_5 = arith.constant 0 : index
    %4 = vector.load %arg3[%c0_4, %c0_5] : memref<32x16xf32, #tpu.memory_space<vmem>>, vector<32x16xf32>
    %cst_6 = arith.constant dense<0.000000e+00> : vector<8x16xf32>
    %5 = tpu.matmul %1, %4, %cst_6 {dimension_numbers = #tpu.dot_dimension_numbers<[1], [0], [0], [1], [0, 0, 1, 1], [], []>} : vector<8x32xf32>, vector<32x16xf32>, vector<8x16xf32> -> vector<8x16xf32>
    %c0_7 = arith.constant 0 : index
    %c0_8 = arith.constant 0 : index
    %6 = vector.load %arg4[%c0_7, %c0_8] : memref<32x16xf32, #tpu.memory_space<vmem>>, vector<32x16xf32>
    %cst_9 = arith.constant dense<0.000000e+00> : vector<8x16xf32>
    %7 = tpu.matmul %1, %6, %cst_9 {dimension_numbers = #tpu.dot_dimension_numbers<[1], [0], [0], [1], [0, 0, 1, 1], [], []>} : vector<8x32xf32>, vector<32x16xf32>, vector<8x16xf32> -> vector<8x16xf32>
    %cst_10 = arith.constant dense<0.000000e+00> : vector<8x8xf32>
    %8 = tpu.matmul %3, %5, %cst_10 {dimension_numbers = #tpu.dot_dimension_numbers<[1], [1], [0], [0], [0, 0, 1, 0], [], []>} : vector<8x16xf32>, vector<8x16xf32>, vector<8x8xf32> -> vector<8x8xf32>
    %cst_11 = arith.constant 2.500000e-01 : f32
    %9 = vector.broadcast %cst_11 : f32 to vector<8x8xf32>
    %10 = arith.mulf %8, %9 : vector<8x8xf32>
    %11 = tpu.iota {dimensions = array<i32: 0>} : vector<8x8xi32>
    %12 = tpu.iota {dimensions = array<i32: 1>} : vector<8x8xi32>
    %13 = arith.cmpi sle, %12, %11 : vector<8x8xi32>
    %cst_12 = arith.constant 0xFF800000 : f32
    %14 = vector.broadcast %cst_12 : f32 to vector<8x8xf32>
    %15 = arith.select %13, %10, %14 : vector<8x8xi1>, vector<8x8xf32>
    %cst_13 = arith.constant dense<0xFF800000> : vector<8xf32>
    %16 = vector.multi_reduction <maximumf>, %15, %cst_13 [1] : vector<8x8xf32> to vector<8xf32>
    %17 = vector.shape_cast %16 : vector<8xf32> to vector<8x1xf32>
    %18 = vector.broadcast %17 : vector<8x1xf32> to vector<8x8xf32>
    %19 = arith.subf %15, %18 : vector<8x8xf32>
    %20 = math.exp %19 : vector<8x8xf32>
    %cst_14 = arith.constant dense<0.000000e+00> : vector<8xf32>
    %21 = vector.multi_reduction <add>, %20, %cst_14 [1] : vector<8x8xf32> to vector<8xf32>
    %22 = vector.shape_cast %21 : vector<8xf32> to vector<8x1xf32>
    %cst_15 = arith.constant dense<0.000000e+00> : vector<8x16xf32>
    %23 = tpu.matmul %20, %7, %cst_15 {dimension_numbers = #tpu.dot_dimension_numbers<[1], [0], [0], [1], [0, 0, 1, 1], [], []>} : vector<8x8xf32>, vector<8x16xf32>, vector<8x16xf32> -> vector<8x16xf32>
    %24 = tpu.reciprocal %22 : vector<8x1xf32> -> vector<8x1xf32>
    %25 = vector.broadcast %24 : vector<8x1xf32> to vector<8x16xf32>
    %26 = arith.mulf %23, %25 : vector<8x16xf32>
    %c0_16 = arith.constant 0 : index
    %c0_17 = arith.constant 0 : index
    %c0_18 = arith.constant 0 : index
    %27 = vector.load %arg5[%c0_16, %c0_17, %c0_18] : memref<1x8x16xf32, #tpu.memory_space<vmem>>, vector<1x8x16xf32>
    %28 = vector.shape_cast %27 : vector<1x8x16xf32> to vector<8x16xf32>
    %29 = vector.shape_cast %26 : vector<8x16xf32> to vector<1x8x16xf32>
    tpu.vector_store %arg5[%c0_16, %c0_17, %c0_18], %29 {strides = array<i32>} : memref<1x8x16xf32, #tpu.memory_space<vmem>>, vector<1x8x16xf32>,
    return
  }
  func.func @transform_0(%arg0: i32) -> (i32, i32, i32) {
    %c0_i32 = arith.constant 0 : i32
    %c0_i32_0 = arith.constant 0 : i32
    %c0_i32_1 = arith.constant 0 : i32
    return %arg0, %c0_i32, %c0_i32_0 : i32, i32, i32
  }
  func.func @transform_1(%arg0: i32) -> (i32, i32) {
    %c0_i32 = arith.constant 0 : i32
    %c0_i32_0 = arith.constant 0 : i32
    %c0_i32_1 = arith.constant 0 : i32
    return %c0_i32, %c0_i32_0 : i32, i32
  }
  func.func @transform_2(%arg0: i32) -> (i32, i32) {
    %c0_i32 = arith.constant 0 : i32
    %c0_i32_0 = arith.constant 0 : i32
    %c0_i32_1 = arith.constant 0 : i32
    return %c0_i32, %c0_i32_0 : i32, i32
  }
  func.func @transform_3(%arg0: i32) -> (i32, i32) {
    %c0_i32 = arith.constant 0 : i32
    %c0_i32_0 = arith.constant 0 : i32
    %c0_i32_1 = arith.constant 0 : i32
    return %c0_i32, %c0_i32_0 : i32, i32
  }
  func.func @transform_4(%arg0: i32) -> (i32, i32, i32) {
    %c0_i32 = arith.constant 0 : i32
    %c0_i32_0 = arith.constant 0 : i32
    %c0_i32_1 = arith.constant 0 : i32
    return %arg0, %c0_i32, %c0_i32_0 : i32, i32, i32
  }
}

</mosaic_0001>

<llo_original>
// kernel: head_forward.1
$region0: #{head_forward.1}
  #allocation0 [shape = 'u32[]', space=smem, size = 0x4, offset = 0x4, fixed_abs, tag = 'smem constant byte address 0x4 - core index']
  #allocation1 [shape = 'u32[144,128]{1,0:T(1,128)}', space=vmem, size = 0x12000, scoped, tag = 'internal scratch']
  %s0 = inlined_call_operand.vmem [shape: f32[2,8,32], index: 0, kind: input, shape index: {}]
  %s1 = inlined_call_operand.vmem [shape: f32[32,16], index: 1, kind: input, shape index: {}]
  %s2 = inlined_call_operand.vmem [shape: f32[32,16], index: 2, kind: input, shape index: {}]
  %s3 = inlined_call_operand.vmem [shape: f32[32,16], index: 3, kind: input, shape index: {}]
  %s4 = inlined_call_operand.hbm [shape: f32[2,8,16], index: 4, kind: output, shape index: {}]
  %s5 = sld [smem:[#allocation0]]
  $region49: #{head_forward.1} parent=0
    _
  %s7 = ssub.s32 1, %s5
  %s8 = scalar_select 0, %s7, %s5
  $region1: #{head_forward.1} parent=0
    #allocation2 [shape = 'u8[8192]{0}', space=vmem, size = 0x2000, scoped, tag = 'output window, operand 0']
    #allocation3 [shape = 's32[2]{0}', space=sflag, size = 0x8, scoped, tag = 'scoped memory for head_forward.1']
    %9 = vsyncpa [#allocation3], 0
    %s10 = scalar_lea.sflag [#allocation3], 1
    %11 = vsyncpa %s10, 0
    loop: start=0, step=1, limit=4
    $region2: #{head_forward.1} parent=1 // loop_pre_header
      _
    $region3: #{head_forward.1} parent=1 // loop_header
      %s13 = sphi 0, %s17
      %p14 = scmp.ge.s32.totalorder %s13, 4
      %s23 = sphi 0, %s25
      %s26 = sphi 0, %s23
      %s27 = sphi 0, %s26
      %s43 = sphi 0, %s27
      %s47 = sphi 0, %s47
      %s49 = sphi 0, %s47
      %s50 = sphi 0, %s49
      %s64 = sphi 0, %s50
      %s68 = sphi 0, %s68
      %s70 = sphi 0, %s68
      %s71 = sphi 0, %s70
      %s85 = sphi 0, %s71
      %s89 = sphi 0, %s89
      %s91 = sphi 0, %s89
      %s92 = sphi 0, %s91
      %s106 = sphi 0, %s92
      %s112 = sphi 0, %s114
      %s115 = sphi 0, %s112
      %s116 = sphi 0, %s115
      %s132 = sphi 0, %s116
    $region4: #{head_forward.1} parent=1 // loop_header_branch
      %16 = sbr.rel (%p14) target = $region8
    $region5: #{head_forward.1} parent=1 // loop_body
      %s18 = ssub.s32 %s13, 1
      %s19 = ssub.s32 %s13, 2
      %s20 = sadd.s32 %s13, 1
      %s21 = ssub.s32 %s13, %s20
      %p22 = scmp.eq.s32.totalorder %s21, 0
      %s24 = sadd.s32 %s23, 1
      %s25 = scalar_select %p22, %s23, %s24
      %p28 = pneg %p22
      %p29 = scmp.eq.s32.totalorder %s13, 1
      %p30 = por %p28, %p29
      %p31 = scmp.ne.s32.totalorder %s23, %s26
      %p32 = scmp.eq.s32.totalorder %s13, 0
      %p33 = por %p31, %p32
      %p34 = scmp.ne.s32.totalorder %s23, %s26
      %p35 = scmp.eq.s32.totalorder %s18, 1
      %p36 = por %p34, %p35
      %p37 = scmp.ne.s32.totalorder %s26, %s27
      %p38 = scmp.eq.s32.totalorder %s18, 0
      %p39 = por %p37, %p38
      %p40 = scmp.ne.s32.totalorder %s26, %s27
      %p41 = scmp.eq.s32.totalorder %s19, 1
      %p42 = por %p40, %p41
      %p44 = scmp.ne.s32.totalorder %s27, %s43
      %p45 = scmp.eq.s32.totalorder %s19, 0
      %p46 = por %p44, %p45
      %s48 = sadd.s32 %s47, 1
      %p51 = scmp.eq.s32.totalorder %s13, 1
      %p52 = scmp.ne.s32.totalorder %s47, %s49
      %p53 = scmp.eq.s32.totalorder %s13, 0
      %p54 = por %p52, %p53
      %p55 = scmp.ne.s32.totalorder %s47, %s49
      %p56 = scmp.eq.s32.totalorder %s18, 1
      %p57 = por %p55, %p56
      %p58 = scmp.ne.s32.totalorder %s49, %s50
      %p59 = scmp.eq.s32.totalorder %s18, 0
      %p60 = por %p58, %p59
      %p61 = scmp.ne.s32.totalorder %s49, %s50
      %p62 = scmp.eq.s32.totalorder %s19, 1
      %p63 = por %p61, %p62
      %p65 = scmp.ne.s32.totalorder %s50, %s64
      %p66 = scmp.eq.s32.totalorder %s19, 0
      %p67 = por %p65, %p66
      %s69 = sadd.s32 %s68, 1
      %p72 = scmp.eq.s32.totalorder %s13, 1
      %p73 = scmp.ne.s32.totalorder %s68, %s70
      %p74 = scmp.eq.s32.totalorder %s13, 0
      %p75 = por %p73, %p74
      %p76 = scmp.ne.s32.totalorder %s68, %s70
      %p77 = scmp.eq.s32.totalorder %s18, 1
      %p78 = por %p76, %p77
      %p79 = scmp.ne.s32.totalorder %s70, %s71
      %p80 = scmp.eq.s32.totalorder %s18, 0
      %p81 = por %p79, %p80
      %p82 = scmp.ne.s32.totalorder %s70, %s71
      %p83 = scmp.eq.s32.totalorder %s19, 1
      %p84 = por %p82, %p83
      %p86 = scmp.ne.s32.totalorder %s71, %s85
      %p87 = scmp.eq.s32.totalorder %s19, 0
      %p88 = por %p86, %p87
      %s90 = sadd.s32 %s89, 1
      %p93 = scmp.eq.s32.totalorder %s13, 1
      %p94 = scmp.ne.s32.totalorder %s89, %s91
      %p95 = scmp.eq.s32.totalorder %s13, 0
      %p96 = por %p94, %p95
      %p97 = scmp.ne.s32.totalorder %s89, %s91
      %p98 = scmp.eq.s32.totalorder %s18, 1
      %p99 = por %p97, %p98
      %p100 = scmp.ne.s32.totalorder %s91, %s92
      %p101 = scmp.eq.s32.totalorder %s18, 0
      %p102 = por %p100, %p101
      %p103 = scmp.ne.s32.totalorder %s91, %s92
      %p104 = scmp.eq.s32.totalorder %s19, 1
      %p105 = por %p103, %p104
      %p107 = scmp.ne.s32.totalorder %s92, %s106
      %p108 = scmp.eq.s32.totalorder %s19, 0
      %p109 = por %p107, %p108
      %s110 = ssub.s32 %s13, %s20
      %p111 = scmp.eq.s32.totalorder %s110, 0
      %s113 = sadd.s32 %s112, 1
      %s114 = scalar_select %p111, %s112, %s113
      %p117 = pneg %p111
      %p118 = scmp.eq.s32.totalorder %s13, 1
      %p119 = por %p117, %p118
      %p120 = scmp.ne.s32.totalorder %s112, %s115
      %p121 = scmp.eq.s32.totalorder %s13, 0
      %p122 = por %p120, %p121
      %p123 = scmp.ne.s32.totalorder %s112, %s115
      %p124 = scmp.eq.s32.totalorder %s18, 1
      %p125 = por %p123, %p124
      %p126 = scmp.ne.s32.totalorder %s115, %s116
      %p127 = scmp.eq.s32.totalorder %s18, 0
      %p128 = por %p126, %p127
      %p129 = scmp.ne.s32.totalorder %s115, %s116
      %p130 = scmp.eq.s32.totalorder %s19, 1
      %p131 = por %p129, %p130
      %p133 = scmp.ne.s32.totalorder %s116, %s132
      %p134 = scmp.eq.s32.totalorder %s19, 0
      %p135 = por %p133, %p134
      %p136 = scmp.le.s32.totalorder 1, %s13
      %p137 = scmp.lt.s32.totalorder %s13, 3
      %p138 = pnand %p136, %p137
      %p139 = pneg %p138
      // Predicated region
      $region9: #{head_forward.1} parent=5 // pred_check
        _
      $region10: #{head_forward.1} parent=5 // pred_check_branch
        %141 = sbr.rel (%p138) target = $region12
      $region11: #{head_forward.1} parent=5 // pred_region
        %s142 = ssub.s32 %s13, 1
        // Predicated region
        $region13: #{head_forward.1} parent=11 // pred_check
          %p143 = pneg %p60
        $region14: #{head_forward.1} parent=11 // pred_check_branch
          %145 = sbr.rel (%p143) target = $region16
        $region15: #{head_forward.1} parent=11 // pred_region
          _
        $region16: #{head_forward.1} parent=11 // pred_fallthru
          _
        // Predicated region
        $region17: #{head_forward.1} parent=11 // pred_check
          %p146 = pneg %p81
        $region18: #{head_forward.1} parent=11 // pred_check_branch
          %148 = sbr.rel (%p146) target = $region20
        $region19: #{head_forward.1} parent=11 // pred_region
          _
        $region20: #{head_forward.1} parent=11 // pred_fallthru
          _
        // Predicated region
        $region21: #{head_forward.1} parent=11 // pred_check
          %p149 = pneg %p102
        $region22: #{head_forward.1} parent=11 // pred_check_branch
          %151 = sbr.rel (%p149) target = $region24
        $region23: #{head_forward.1} parent=11 // pred_region
          _
        $region24: #{head_forward.1} parent=11 // pred_fallthru
          _
      $region12: #{head_forward.1} parent=5 // pred_fallthru
        _
      %p152 = scmp.lt.s32.totalorder %s13, 2
      // Predicated region
      $region25: #{head_forward.1} parent=5 // pred_check
        %p153 = pneg %p152
      $region26: #{head_forward.1} parent=5 // pred_check_branch
        %155 = sbr.rel (%p153) target = $region28
      $region27: #{head_forward.1} parent=5 // pred_region
        // Predicated region
        $region29: #{head_forward.1} parent=27 // pred_check
          %p156 = pneg %p33
        $region30: #{head_forward.1} parent=27 // pred_check_branch
          %158 = sbr.rel (%p156) target = $region32
        $region31: #{head_forward.1} parent=27 // pred_region
          %p159 = scmp.lt.s32.totalorder %s13, 1
          %s160 = scalar_select %p159, %s13, 1
          %s161 = smul.addr %s160, 8
          %s162 = scalar_lea.vmem %s0, %s161
        $region32: #{head_forward.1} parent=27 // pred_fallthru
          _
      $region28: #{head_forward.1} parent=5 // pred_fallthru
        _
      %p163 = scmp.le.s32.totalorder 1, %s13
      %p164 = scmp.lt.s32.totalorder %s13, 3
      %p165 = pnand %p163, %p164
      %p166 = pneg %p165
      // Predicated region
      $region33: #{head_forward.1} parent=5 // pred_check
        _
      $region34: #{head_forward.1} parent=5 // pred_check_branch
        %168 = sbr.rel (%p165) target = $region36
      $region35: #{head_forward.1} parent=5 // pred_region
        %s169 = ssub.s32 %s13, 1
        %p170 = scmp.lt.s32.totalorder %s18, 1
        %s171 = scalar_select %p170, %s18, 1
        %s172 = smul.addr %s171, 8
        %s173 = scalar_lea.vmem %s0, %s172
        %p174 = pneg %p39
        %p175 = pneg %p36
        %p176 = pneg %p60
        %p177 = pneg %p57
        %p178 = pneg %p81
        %p179 = pneg %p78
        %p180 = pneg %p102
        %p181 = pneg %p99
        %p182 = pneg %p128
        %p183 = pneg %p125
        %s184 = sand.u32 %s115, 1
        %s185 = scalar_lea.sflag [#allocation3], %s184
        %s186 = sand.u32 %s115, 1
        %s187 = smul.addr %s186, 8
        %s188 = scalar_lea.vmem [#allocation2], %s187
        %p189 = scmp.lt.s32.totalorder %s18, 1
        %s190 = scalar_select %p189, %s18, 1
        %s191 = smul.addr %s190, 8
        %s192 = scalar_lea.vmem %s0, %s191
        %v193 = vld [vmem:[%s192] sm:$0xff]
        %v194 = vld [vmem:[%s1] sm:$0xff]
        %v195 = vld [vmem:[%s1 + $0x8] sm:$0xff]
        %v196 = vld [vmem:[%s1 + $0x10] sm:$0xff]
        %v197 = vld [vmem:[%s1 + $0x18] sm:$0xff]
        %vm198 = vcmask 261120
        %v200 = vsel %vm198, %v193, 0
        %202 = vmatprep.subr.mxu0 0.0
        %203 = vmatpush1.msra.mxu0 %v194
        %204 = vmatprep.subr.mxu0 0.0
        %205 = vmatpush1.msra.mxu0 %v195
        %206 = vmatprep.subr.mxu0 0.0
        %207 = vmatpush1.msra.mxu0 %v196
        %208 = vmatprep.subr.mxu0 0.0
        %209 = vmatpush1.msra.mxu0 %v197
        %210 = vmatprep.subr.mxu0 0.0
        %211 = vmatpush1.msra.mxu0 0.0
        %212 = vmatprep.subr.mxu0 0.0
        %213 = vmatpush1.msra.mxu0 0.0
        %214 = vmatprep.subr.mxu0 0.0
        %215 = vmatpush1.msra.mxu0 0.0
        %216 = vmatprep.subr.mxu0 0.0
        %217 = vmatpush1.msra.mxu0 0.0
        %218 = vmatprep.subr.mxu0 0.0
        %219 = vmatpush1.msra.mxu0 0.0
        %220 = vmatprep.subr.mxu0 0.0
        %221 = vmatpush1.msra.mxu0 0.0
        %222 = vmatprep.subr.mxu0 0.0
        %223 = vmatpush1.msra.mxu0 0.0
        %224 = vmatprep.subr.mxu0 0.0
        %225 = vmatpush1.msra.mxu0 0.0
        %226 = vmatprep.subr.mxu0 0.0
        %227 = vmatpush1.msra.mxu0 0.0
        %228 = vmatprep.subr.mxu0 0.0
        %229 = vmatpush1.msra.mxu0 0.0
        %230 = vmatprep.subr.mxu0 0.0
        %231 = vmatpush1.msra.mxu0 0.0
        %232 = vmatprep.subr.mxu0 0.0
        %233 = vmatpush1.msra.mxu0 0.0
        %234 = vmatprep.subr.mxu0 0.0
        %235 = vmatpush1.msra.mxu0 0.0
        %236 = vmatprep.subr.mxu0 0.0
        %237 = vmatpush1.msra.mxu0 0.0
        %238 = vmatprep.subr.mxu0 0.0
        %239 = vmatpush1.msra.mxu0 0.0
        %240 = vmatprep.subr.mxu0 0.0
        %241 = vmatpush1.msra.mxu0 0.0
        %242 = vmatprep.subr.mxu0 0.0
        %243 = vmatpush1.msra.mxu0 0.0
        %244 = vmatprep.subr.mxu0 0.0
        %245 = vmatpush1.msra.mxu0 0.0
        %246 = vmatprep.subr.mxu0 0.0
        %247 = vmatpush1.msra.mxu0 0.0
        %248 = vmatprep.subr.mxu0 0.0
        %249 = vmatpush1.msra.mxu0 0.0
        %250 = vmatprep.subr.mxu0 0.0
        %251 = vmatpush1.msra.mxu0 0.0
        %252 = vmatprep.subr.mxu0 0.0
        %253 = vmatpush1.msra.mxu0 0.0
        %254 = vmatprep.subr.mxu0 0.0
        %255 = vmatpush1.msra.mxu0 0.0
        %256 = vmatprep.subr.mxu0 0.0
        %257 = vmatpush1.msra.mxu0 0.0
        %258 = vmatprep.subr.mxu0 0.0
        %259 = vmatpush1.msra.mxu0 0.0
        %260 = vmatprep.subr.mxu0 0.0
        %261 = vmatpush1.msra.mxu0 0.0
        %262 = vmatprep.subr.mxu0 0.0
        %263 = vmatpush1.msra.mxu0 0.0
        %264 = vmatprep.subr.mxu0 0.0
        %265 = vmatpush1.msra.mxu0 0.0
        %266 = vmatprep.mubr.f32.mxu0 0.0
        %267 = vmatmul.mubr.f32.gmra.mrb[0].mxu0 %v200
        %v268 = vpop.f32.mrb[0].mxu0
        %v269 = vadd.f32 0.0, %v268
        %v270 = vpop.f32.mrb[0].mxu0
        %271 = vdwg.mxu0
        %v272 = vld [vmem:[%s2] sm:$0xff]
        %v273 = vld [vmem:[%s2 + $0x8] sm:$0xff]
        %v274 = vld [vmem:[%s2 + $0x10] sm:$0xff]
        %v275 = vld [vmem:[%s2 + $0x18] sm:$0xff]
        %276 = vmatprep.subr.mxu0 0.0
        %277 = vmatpush1.msra.mxu0 %v272
        %278 = vmatprep.subr.mxu0 0.0
        %279 = vmatpush1.msra.mxu0 %v273
        %280 = vmatprep.subr.mxu0 0.0
        %281 = vmatpush1.msra.mxu0 %v274
        %282 = vmatprep.subr.mxu0 0.0
        %283 = vmatpush1.msra.mxu0 %v275
        %284 = vmatprep.subr.mxu0 0.0
        %285 = vmatpush1.msra.mxu0 0.0
        %286 = vmatprep.subr.mxu0 0.0
        %287 = vmatpush1.msra.mxu0 0.0
        %288 = vmatprep.subr.mxu0 0.0
        %289 = vmatpush1.msra.mxu0 0.0
        %290 = vmatprep.subr.mxu0 0.0
        %291 = vmatpush1.msra.mxu0 0.0
        %292 = vmatprep.subr.mxu0 0.0
        %293 = vmatpush1.msra.mxu0 0.0
        %294 = vmatprep.subr.mxu0 0.0
        %295 = vmatpush1.msra.mxu0 0.0
        %296 = vmatprep.subr.mxu0 0.0
        %297 = vmatpush1.msra.mxu0 0.0
        %298 = vmatprep.subr.mxu0 0.0
        %299 = vmatpush1.msra.mxu0 0.0
        %300 = vmatprep.subr.mxu0 0.0
        %301 = vmatpush1.msra.mxu0 0.0
        %302 = vmatprep.subr.mxu0 0.0
        %303 = vmatpush1.msra.mxu0 0.0
        %304 = vmatprep.subr.mxu0 0.0
        %305 = vmatpush1.msra.mxu0 0.0
        %306 = vmatprep.subr.mxu0 0.0
        %307 = vmatpush1.msra.mxu0 0.0
        %308 = vmatprep.subr.mxu0 0.0
        %309 = vmatpush1.msra.mxu0 0.0
        %310 = vmatprep.subr.mxu0 0.0
        %311 = vmatpush1.msra.mxu0 0.0
        %312 = vmatprep.subr.mxu0 0.0
        %313 = vmatpush1.msra.mxu0 0.0
        %314 = vmatprep.subr.mxu0 0.0
        %315 = vmatpush1.msra.mxu0 0.0
        %316 = vmatprep.subr.mxu0 0.0
        %317 = vmatpush1.msra.mxu0 0.0
        %318 = vmatprep.subr.mxu0 0.0
        %319 = vmatpush1.msra.mxu0 0.0
        %320 = vmatprep.subr.mxu0 0.0
        %321 = vmatpush1.msra.mxu0 0.0
        %322 = vmatprep.subr.mxu0 0.0
        %323 = vmatpush1.msra.mxu0 0.0
        %324 = vmatprep.subr.mxu0 0.0
        %325 = vmatpush1.msra.mxu0 0.0
        %326 = vmatprep.subr.mxu0 0.0
        %327 = vmatpush1.msra.mxu0 0.0
        %328 = vmatprep.subr.mxu0 0.0
        %329 = vmatpush1.msra.mxu0 0.0
        %330 = vmatprep.subr.mxu0 0.0
        %331 = vmatpush1.msra.mxu0 0.0
        %332 = vmatprep.subr.mxu0 0.0
        %333 = vmatpush1.msra.mxu0 0.0
        %334 = vmatprep.subr.mxu0 0.0
        %335 = vmatpush1.msra.mxu0 0.0
        %336 = vmatprep.subr.mxu0 0.0
        %337 = vmatpush1.msra.mxu0 0.0
        %338 = vmatprep.subr.mxu0 0.0
        %339 = vmatpush1.msra.mxu0 0.0
        %340 = vmatprep.mubr.f32.mxu0 0.0
        %341 = vmatmul.mubr.f32.gmra.mrb[0].mxu0 %v200
        %v342 = vpop.f32.mrb[0].mxu0
        %v343 = vadd.f32 0.0, %v342
        %v344 = vpop.f32.mrb[0].mxu0
        %345 = vdwg.mxu0
        %v346 = vld [vmem:[%s3] sm:$0xff]
        %v347 = vld [vmem:[%s3 + $0x8] sm:$0xff]
        %v348 = vld [vmem:[%s3 + $0x10] sm:$0xff]
        %v349 = vld [vmem:[%s3 + $0x18] sm:$0xff]
        %350 = vmatprep.subr.mxu0 0.0
        %351 = vmatpush1.msra.mxu0 %v346
        %352 = vmatprep.subr.mxu0 0.0
        %353 = vmatpush1.msra.mxu0 %v347
        %354 = vmatprep.subr.mxu0 0.0
        %355 = vmatpush1.msra.mxu0 %v348
        %356 = vmatprep.subr.mxu0 0.0
        %357 = vmatpush1.msra.mxu0 %v349
        %358 = vmatprep.subr.mxu0 0.0
        %359 = vmatpush1.msra.mxu0 0.0
        %360 = vmatprep.subr.mxu0 0.0
        %361 = vmatpush1.msra.mxu0 0.0
        %362 = vmatprep.subr.mxu0 0.0
        %363 = vmatpush1.msra.mxu0 0.0
        %364 = vmatprep.subr.mxu0 0.0
        %365 = vmatpush1.msra.mxu0 0.0
        %366 = vmatprep.subr.mxu0 0.0
        %367 = vmatpush1.msra.mxu0 0.0
        %368 = vmatprep.subr.mxu0 0.0
        %369 = vmatpush1.msra.mxu0 0.0
        %370 = vmatprep.subr.mxu0 0.0
        %371 = vmatpush1.msra.mxu0 0.0
        %372 = vmatprep.subr.mxu0 0.0
        %373 = vmatpush1.msra.mxu0 0.0
        %374 = vmatprep.subr.mxu0 0.0
        %375 = vmatpush1.msra.mxu0 0.0
        %376 = vmatprep.subr.mxu0 0.0
        %377 = vmatpush1.msra.mxu0 0.0
        %378 = vmatprep.subr.mxu0 0.0
        %379 = vmatpush1.msra.mxu0 0.0
        %380 = vmatprep.subr.mxu0 0.0
        %381 = vmatpush1.msra.mxu0 0.0
        %382 = vmatprep.subr.mxu0 0.0
        %383 = vmatpush1.msra.mxu0 0.0
        %384 = vmatprep.subr.mxu0 0.0
        %385 = vmatpush1.msra.mxu0 0.0
        %386 = vmatprep.subr.mxu0 0.0
        %387 = vmatpush1.msra.mxu0 0.0
        %388 = vmatprep.subr.mxu0 0.0
        %389 = vmatpush1.msra.mxu0 0.0
        %390 = vmatprep.subr.mxu0 0.0
        %391 = vmatpush1.msra.mxu0 0.0
        %392 = vmatprep.subr.mxu0 0.0
        %393 = vmatpush1.msra.mxu0 0.0
        %394 = vmatprep.subr.mxu0 0.0
        %395 = vmatpush1.msra.mxu0 0.0
        %396 = vmatprep.subr.mxu0 0.0
        %397 = vmatpush1.msra.mxu0 0.0
        %398 = vmatprep.subr.mxu0 0.0
        %399 = vmatpush1.msra.mxu0 0.0
        %400 = vmatprep.subr.mxu0 0.0
        %401 = vmatpush1.msra.mxu0 0.0
        %402 = vmatprep.subr.mxu0 0.0
        %403 = vmatpush1.msra.mxu0 0.0
        %404 = vmatprep.subr.mxu0 0.0
        %405 = vmatpush1.msra.mxu0 0.0
        %406 = vmatprep.subr.mxu0 0.0
        %407 = vmatpush1.msra.mxu0 0.0
        %408 = vmatprep.subr.mxu0 0.0
        %409 = vmatpush1.msra.mxu0 0.0
        %410 = vmatprep.subr.mxu0 0.0
        %411 = vmatpush1.msra.mxu0 0.0
        %412 = vmatprep.subr.mxu0 0.0
        %413 = vmatpush1.msra.mxu0 0.0
        %414 = vmatprep.mubr.f32.mxu0 0.0
        %415 = vmatmul.mubr.f32.gmra.mrb[0].mxu0 %v200
        %v416 = vpop.f32.mrb[0].mxu0
        %v417 = vadd.f32 0.0, %v416
        %v418 = vpop.f32.mrb[0].mxu0
        %419 = vdwg.mxu0
        %vm420 = vcmask 130048
        %v422 = vsel %vm420, %v269, 0
        %v425 = vsel %vm420, %v343, 0
        %427 = vmatprep.subr.mxu0 0.0
        %428 = vmatpush1.xpose.msra.mxu0 %v425
        %429 = vmatprep.subr.mxu0 0.0
        %430 = vmatpush1.xpose.msra.mxu0 0.0
        %431 = vmatprep.subr.mxu0 0.0
        %432 = vmatpush1.xpose.msra.mxu0 0.0
        %433 = vmatprep.subr.mxu0 0.0
        %434 = vmatpush1.xpose.msra.mxu0 0.0
        %435 = vmatprep.subr.mxu0 0.0
        %436 = vmatpush1.xpose.msra.mxu0 0.0
        %437 = vmatprep.subr.mxu0 0.0
        %438 = vmatpush1.xpose.msra.mxu0 0.0
        %439 = vmatprep.subr.mxu0 0.0
        %440 = vmatpush1.xpose.msra.mxu0 0.0
        %441 = vmatprep.subr.mxu0 0.0
        %442 = vmatpush1.xpose.msra.mxu0 0.0
        %443 = vmatprep.subr.mxu0 0.0
        %444 = vmatpush1.xpose.msra.mxu0 0.0
        %445 = vmatprep.subr.mxu0 0.0
        %446 = vmatpush1.xpose.msra.mxu0 0.0
        %447 = vmatprep.subr.mxu0 0.0
        %448 = vmatpush1.xpose.msra.mxu0 0.0
        %449 = vmatprep.subr.mxu0 0.0
        %450 = vmatpush1.xpose.msra.mxu0 0.0
        %451 = vmatprep.subr.mxu0 0.0
        %452 = vmatpush1.xpose.msra.mxu0 0.0
        %453 = vmatprep.subr.mxu0 0.0
        %454 = vmatpush1.xpose.msra.mxu0 0.0
        %455 = vmatprep.subr.mxu0 0.0
        %456 = vmatpush1.xpose.msra.mxu0 0.0
        %457 = vmatprep.subr.mxu0 0.0
        %458 = vmatpush1.xpose.msra.mxu0 0.0
        %459 = vmatprep.subr.mxu0 0.0
        %460 = vmatpush1.xpose.msra.mxu0 0.0
        %461 = vmatprep.subr.mxu0 0.0
        %462 = vmatpush1.xpose.msra.mxu0 0.0
        %463 = vmatprep.subr.mxu0 0.0
        %464 = vmatpush1.xpose.msra.mxu0 0.0
        %465 = vmatprep.subr.mxu0 0.0
        %466 = vmatpush1.xpose.msra.mxu0 0.0
        %467 = vmatprep.subr.mxu0 0.0
        %468 = vmatpush1.xpose.msra.mxu0 0.0
        %469 = vmatprep.subr.mxu0 0.0
        %470 = vmatpush1.xpose.msra.mxu0 0.0
        %471 = vmatprep.subr.mxu0 0.0
        %472 = vmatpush1.xpose.msra.mxu0 0.0
        %473 = vmatprep.subr.mxu0 0.0
        %474 = vmatpush1.xpose.msra.mxu0 0.0
        %475 = vmatprep.subr.mxu0 0.0
        %476 = vmatpush1.xpose.msra.mxu0 0.0
        %477 = vmatprep.subr.mxu0 0.0
        %478 = vmatpush1.xpose.msra.mxu0 0.0
        %479 = vmatprep.subr.mxu0 0.0
        %480 = vmatpush1.xpose.msra.mxu0 0.0
        %481 = vmatprep.subr.mxu0 0.0
        %482 = vmatpush1.xpose.msra.mxu0 0.0
        %483 = vmatprep.subr.mxu0 0.0
        %484 = vmatpush1.xpose.msra.mxu0 0.0
        %485 = vmatprep.subr.mxu0 0.0
        %486 = vmatpush1.xpose.msra.mxu0 0.0
        %487 = vmatprep.subr.mxu0 0.0
        %488 = vmatpush1.xpose.msra.mxu0 0.0
        %489 = vmatprep.subr.mxu0 0.0
        %490 = vmatpush1.xpose.msra.mxu0 0.0
        %491 = vmatprep.mubr.f32.mxu0 0.0
        %492 = vmatmul.mubr.f32.gmra.mrb[0].mxu0 %v422
        %v493 = vpop.f32.mrb[0].mxu0
        %v494 = vadd.f32 0.0, %v493
        %v495 = vpop.f32.mrb[0].mxu0
        %496 = vdwg.mxu0
        %v497 = vmul.f32 %v494, 0.25
        %v498 = vlaneseq
        %v499 = vshrl.u32 %v498, 7
        %v500 = vlaneseq
        %v501 = vand.u32 %v500, 127
        %vm502 = vcmp.le.s32.totalorder %v501, %v499
        %v503 = vsel %vm502, %v497, -inf
        %vm504 = vcmask 64512
        %v505 = vsel %vm504, %v503, -inf
        %506 = vmax.xlane.f32.xlu0 %v505
        %v507 = vpop.xlane.xlu0 %506
        %v508 = vsub.f32 %v503, %v507
        %v509 = vmul.f32 %v508, 1.442695
        %v510 = vpow.pop %v509
        %v511 = vsel %vm504, %v510, 0.0
        %512 = vadd.xlane.f32.xlu0 %v511
        %v513 = vpop.xlane.xlu0 %512
        %v515 = vsel %vm504, %v510, 0
        %517 = vmatprep.subr.mxu0 0.0
        %518 = vmatpush1.msra.mxu0 %v417
        %519 = vmatprep.subr.mxu0 0.0
        %520 = vmatpush1.msra.mxu0 0.0
        %521 = vmatprep.subr.mxu0 0.0
        %522 = vmatpush1.msra.mxu0 0.0
        %523 = vmatprep.subr.mxu0 0.0
        %524 = vmatpush1.msra.mxu0 0.0
        %525 = vmatprep.subr.mxu0 0.0
        %526 = vmatpush1.msra.mxu0 0.0
        %527 = vmatprep.subr.mxu0 0.0
        %528 = vmatpush1.msra.mxu0 0.0
        %529 = vmatprep.subr.mxu0 0.0
        %530 = vmatpush1.msra.mxu0 0.0
        %531 = vmatprep.subr.mxu0 0.0
        %532 = vmatpush1.msra.mxu0 0.0
        %533 = vmatprep.subr.mxu0 0.0
        %534 = vmatpush1.msra.mxu0 0.0
        %535 = vmatprep.subr.mxu0 0.0
        %536 = vmatpush1.msra.mxu0 0.0
        %537 = vmatprep.subr.mxu0 0.0
        %538 = vmatpush1.msra.mxu0 0.0
        %539 = vmatprep.subr.mxu0 0.0
        %540 = vmatpush1.msra.mxu0 0.0
        %541 = vmatprep.subr.mxu0 0.0
        %542 = vmatpush1.msra.mxu0 0.0
        %543 = vmatprep.subr.mxu0 0.0
        %544 = vmatpush1.msra.mxu0 0.0
        %545 = vmatprep.subr.mxu0 0.0
        %546 = vmatpush1.msra.mxu0 0.0
        %547 = vmatprep.subr.mxu0 0.0
        %548 = vmatpush1.msra.mxu0 0.0
        %549 = vmatprep.subr.mxu0 0.0
        %550 = vmatpush1.msra.mxu0 0.0
        %551 = vmatprep.subr.mxu0 0.0
        %552 = vmatpush1.msra.mxu0 0.0
        %553 = vmatprep.subr.mxu0 0.0
        %554 = vmatpush1.msra.mxu0 0.0
        %555 = vmatprep.subr.mxu0 0.0
        %556 = vmatpush1.msra.mxu0 0.0
        %557 = vmatprep.subr.mxu0 0.0
        %558 = vmatpush1.msra.mxu0 0.0
        %559 = vmatprep.subr.mxu0 0.0
        %560 = vmatpush1.msra.mxu0 0.0
        %561 = vmatprep.subr.mxu0 0.0
        %562 = vmatpush1.msra.mxu0 0.0
        %563 = vmatprep.subr.mxu0 0.0
        %564 = vmatpush1.msra.mxu0 0.0
        %565 = vmatprep.subr.mxu0 0.0
        %566 = vmatpush1.msra.mxu0 0.0
        %567 = vmatprep.subr.mxu0 0.0
        %568 = vmatpush1.msra.mxu0 0.0
        %569 = vmatprep.subr.mxu0 0.0
        %570 = vmatpush1.msra.mxu0 0.0
        %571 = vmatprep.subr.mxu0 0.0
        %572 = vmatpush1.msra.mxu0 0.0
        %573 = vmatprep.subr.mxu0 0.0
        %574 = vmatpush1.msra.mxu0 0.0
        %575 = vmatprep.subr.mxu0 0.0
        %576 = vmatpush1.msra.mxu0 0.0
        %577 = vmatprep.subr.mxu0 0.0
        %578 = vmatpush1.msra.mxu0 0.0
        %579 = vmatprep.subr.mxu0 0.0
        %580 = vmatpush1.msra.mxu0 0.0
        %581 = vmatprep.mubr.f32.mxu0 0.0
        %582 = vmatmul.mubr.f32.gmra.mrb[0].mxu0 %v515
        %v583 = vpop.f32.mrb[0].mxu0
        %v584 = vadd.f32 0.0, %v583
        %v585 = vpop.f32.mrb[0].mxu0
        %586 = vdwg.mxu0
        %v587 = vrcp.pop %v513
        %v588 = vmul.f32 %v584, %v587
        %589 = vst.msk [vmem:[%s188] sm:$0xff] %vm420, %v588
        %s590 = sand.u32 %s115, 1
        %s591 = scalar_lea.sflag [#allocation3], %s590
        %s592 = sand.u32 %s115, 1
        %s593 = smul.addr %s592, 8
        %s594 = scalar_lea.vmem [#allocation2], %s593
        // Predicated region
        $region37: #{head_forward.1} parent=35 // pred_check
          %p595 = pneg %p125
        $region38: #{head_forward.1} parent=35 // pred_check_branch
          %597 = sbr.rel (%p595) target = $region40
        $region39: #{head_forward.1} parent=35 // pred_region
          %s599 = ssub.s32 128, 128
          %600 = vsyncadd %s591, %s599
          %s601 = smul.addr %s18, 128
          %s602 = scalar_lea.hbm %s4, %s601
          %s604 = sshll.u32 %s594, 4
          %s605 = int_to_ptr.vmem [resolvable:$true] %s604
          %607 = dma.vmem_to_hbm [thread:$0]  %s605, 128, %s602, %s591
        $region40: #{head_forward.1} parent=35 // pred_fallthru
          _
      $region36: #{head_forward.1} parent=5 // pred_fallthru
        _
      %p608 = scmp.le.s32.totalorder 2, %s13
      // Predicated region
      $region41: #{head_forward.1} parent=5 // pred_check
        %p609 = pneg %p608
      $region42: #{head_forward.1} parent=5 // pred_check_branch
        %611 = sbr.rel (%p609) target = $region44
      $region43: #{head_forward.1} parent=5 // pred_region
        %s612 = ssub.s32 %s13, 2
        // Predicated region
        $region45: #{head_forward.1} parent=43 // pred_check
          %p613 = pneg %p131
        $region46: #{head_forward.1} parent=43 // pred_check_branch
          %615 = sbr.rel (%p613) target = $region48
        $region47: #{head_forward.1} parent=43 // pred_region
          %s616 = sand.u32 %s116, 1
          %s617 = scalar_lea.sflag [#allocation3], %s616
          %s618 = sand.u32 %s116, 1
          %s619 = smul.addr %s618, 8
          %s620 = scalar_lea.vmem [#allocation2], %s619
          %621 = dma.done %s617, 128
        $region48: #{head_forward.1} parent=43 // pred_fallthru
          _
      $region44: #{head_forward.1} parent=5 // pred_fallthru
        _
    $region6: #{head_forward.1} parent=1 // loop_footer
      %s17 = sadd.s32 1, %s13
    $region7: #{head_forward.1} parent=1 // loop_footer_branch
      %12 = sbr.rel target = $region3
    $region8: #{head_forward.1} parent=1 // loop_exit
      _
    %622 = vsyncpa [#allocation3], 1
    %s623 = scalar_lea.sflag [#allocation3], 1
    %624 = vsyncpa %s623, 1

</llo_original>
